<compile_context>
chip_gen: v6e
topology: v6e:2x2x1
jax: 0.10.0
libtpu: 0.0.40
codegen_flags: <defaults>
</compile_context>

<pallas_src>
import functools

import jax
import jax.numpy as jnp
from jax import lax
from jax.experimental import pallas as pl
from jax.experimental.pallas import tpu as pltpu

ALPHA = 0.5
GAMMA = 1
SMOOTH = 1e-05


def _fold_rows(x, fr):
    # Sum groups of `fr` sublane rows: (TR, 128) -> (fr, 128).  Pure VPU adds on
    # vreg-aligned static slices (no reshape / relayout).
    tr = x.shape[0]
    assert tr % fr == 0
    out = x[:fr]
    for i in range(1, tr // fr):
        out = out + x[i * fr:(i + 1) * fr]
    return out


def _focal_dice_kernel(m_ref, lab_ref, prd_ref, out_ref, *, smooth, gamma,
                       n_valid, tr, fr, rows_per_split, maybe_ragged):
    # m_ref   : (128, 128) bf16 block-diagonal ones (C x C blocks)
    # lab/prd : (TR, 128) block of the flat (pixel-major, channel-minor) input
    # out_ref : (3, FR, 128) resident accumulator [inter, union, focal] lane partials
    s = pl.program_id(1)
    r = pl.program_id(2)

    @pl.when(r == 0)
    def _init():
        out_ref[...] = jnp.zeros_like(out_ref)

    m = m_ref[...]
    lab = lab_ref[...].astype(jnp.float32)
    prd = prd_ref[...].astype(jnp.float32)

    def seg_softmax(x):
        # Softmax over each aligned group of C consecutive lanes (= one pixel).
        # Per-row max is constant within every group -> exact softmax shift.
        g = jnp.max(x, axis=1, keepdims=True)
        e = jnp.exp(x - g)                              # e <= 1, overflow safe
        # Segmented sum + broadcast via block-diagonal matmul on the (idle) MXU.
        # hi/lo split keeps the denominator at ~f32 accuracy with bf16 matmuls.
        e_hi = e.astype(jnp.bfloat16)
        e_lo = (e - e_hi.astype(jnp.float32)).astype(jnp.bfloat16)
        denom = (jnp.dot(e_hi, m, preferred_element_type=jnp.float32)
                 + jnp.dot(e_lo, m, preferred_element_type=jnp.float32))
        denom = jnp.maximum(denom, 1e-30)               # pathological underflow guard
        # Exact division (approx reciprocal is too coarse for the 1e-5 tolerance).
        return e / denom

    p = seg_softmax(prd)
    l = seg_softmax(lab)

    def accumulate(lv, pv):
        inter = _fold_rows(lv * pv, fr)
        union = _fold_rows(lv + pv, fr)
        bce = -lv * jnp.log(pv + smooth)
        if gamma == 1:
            focal_w = 1.0 - pv
        elif isinstance(gamma, int) and gamma > 1:
            base = 1.0 - pv
            focal_w = base
            for _ in range(gamma - 1):
                focal_w = focal_w * base
        else:
            focal_w = jnp.power(1.0 - pv, jnp.float32(gamma))
        foc = _fold_rows(focal_w * bce, fr)             # alpha applied in the wrapper
        out_ref[0, :, :] += inter
        out_ref[1, :, :] += union
        out_ref[2, :, :] += foc

    if maybe_ragged:
        # Logical (unclamped) start row of this block in the flat layout.
        start_row = (s * rows_per_split + r) * tr
        needs_mask = (start_row + tr) * 128 > n_valid

        @pl.when(needs_mask)
        def _ragged():
            rows = lax.broadcasted_iota(jnp.int32, (tr, 128), 0) + start_row
            cols = lax.broadcasted_iota(jnp.int32, (tr, 128), 1)
            ok = rows * 128 + cols < n_valid
            # NaN-safe selects: garbage lanes (incl. any NaN/Inf from softmax on
            # uninitialized rows) contribute exactly zero.
            accumulate(jnp.where(ok, l, 0.0), jnp.where(ok, p, 0.0))

        @pl.when(jnp.logical_not(needs_mask))
        def _full():
            accumulate(l, p)
    else:
        accumulate(l, p)


def _reference(label, prediction, alpha=ALPHA, gamma=GAMMA, smooth=SMOOTH):
    p = jax.nn.softmax(prediction.astype(jnp.float32), axis=3)
    l = jax.nn.softmax(label.astype(jnp.float32), axis=3)
    inter = jnp.sum(l * p, axis=(1, 2))
    union = jnp.sum(l, axis=(1, 2)) + jnp.sum(p, axis=(1, 2))
    dice = (2.0 * inter + smooth) / (union + smooth)
    dice_loss = 1.0 - jnp.mean(dice)
    bce = -l * jnp.log(p + smooth)
    focal = alpha * (1.0 - p) ** gamma * bce
    return dice_loss + jnp.mean(focal)


def focal_dice_loss(label, prediction, *, alpha=ALPHA, gamma=GAMMA, smooth=SMOOTH):
    assert label.shape == prediction.shape and label.ndim == 4
    B, H, W, C = label.shape
    n_valid = H * W * C

    if 128 % C != 0:
        # TODO(synk): the lane-segmented softmax needs C | 128; other channel counts
        # fall back to plain XLA.
        return _reference(label, prediction, alpha, gamma, smooth)

    # Free reshape: (B, H, W, C) -> (B, HW*C) -> (B, R, 128); no transpose pass.
    lab = label.reshape(B, n_valid)
    prd = prediction.reshape(B, n_valid)
    n_flat = pl.cdiv(n_valid, 128) * 128
    if n_flat != n_valid:
        # Rare ragged case: pad the flat axis by < 128 elements to make the 2D view.
        lab = jnp.pad(lab, ((0, 0), (0, n_flat - n_valid)))
        prd = jnp.pad(prd, ((0, 0), (0, n_flat - n_valid)))
    R = n_flat // 128
    lab = lab.reshape(B, R, 128)
    prd = prd.reshape(B, R, 128)

    # Rows per block: >= 1 MiB of DMA per step, small enough to leave plenty of VMEM
    # headroom (usage ~12 MiB incl. double buffers and live temporaries).
    if R >= 8:
        TR = min(2048, (R // 8) * 8)
        FR = 8
    else:
        TR, FR = R, R
    n_rb = pl.cdiv(R, TR)                      # total row blocks
    # Extra parallel axis so both v7x TensorCores stay busy for B == 1 / odd B.
    n_split = 2 if (B % 2 == 1 and n_rb >= 2) else 1
    RS = pl.cdiv(n_rb, n_split)                # row blocks per split

    # Block-diagonal ones (C x C blocks): segmented lane-sum + broadcast in one matmul.
    groups = jnp.arange(128, dtype=jnp.int32) // C
    m = (groups[:, None] == groups[None, :]).astype(jnp.bfloat16)

    maybe_ragged = (n_flat != n_valid) or (n_rb * TR != R) or (n_split * RS != n_rb)

    kernel = functools.partial(
        _focal_dice_kernel, smooth=float(smooth), gamma=gamma, n_valid=n_valid,
        tr=TR, fr=FR, rows_per_split=RS, maybe_ragged=maybe_ragged)

    def row_block(s, r):
        # Clamp so over-covering splits never index past the array; the in-kernel
        # mask (which uses the *logical* start row) zeroes any duplicated reads.
        return jnp.minimum(s * RS + r, n_rb - 1)

    partials = pl.pallas_call(
        kernel,
        out_shape=jax.ShapeDtypeStruct((B, n_split, 3, FR, 128), jnp.float32),
        grid=(B, n_split, RS),                          # reduction axis last
        in_specs=[
            pl.BlockSpec((128, 128), lambda b, s, r: (0, 0)),
            pl.BlockSpec((None, TR, 128), lambda b, s, r: (b, row_block(s, r), 0)),
            pl.BlockSpec((None, TR, 128), lambda b, s, r: (b, row_block(s, r), 0)),
        ],
        out_specs=pl.BlockSpec((None, None, 3, FR, 128),
                               lambda b, s, r: (b, s, 0, 0, 0)),
        compiler_params=pltpu.CompilerParams(
            dimension_semantics=("parallel", "parallel", "arbitrary"),
            vmem_limit_bytes=40 * 1024 * 1024),         # safe on v7x's 64 MiB/TC
    )(m, lab, prd)

    # Lane j holds channel j % C; fold splits / row partials / pixel groups in JAX.
    sums = partials.reshape(B, n_split, 3, FR, 128 // C, C).sum(axis=(1, 3, 4))
    inter = sums[:, 0]                                  # (B, C)
    union = sums[:, 1]                                  # (B, C)
    focal_sum = sums[:, 2]                              # (B, C), alpha not applied yet

    dice = (2.0 * inter + smooth) / (union + smooth)
    dice_loss = 1.0 - jnp.mean(dice)
    focal_loss = alpha * jnp.sum(focal_sum) / jnp.float32(B * H * W * C)
    return dice_loss + focal_loss


def _check(key, shape):
    k1, k2 = jax.random.split(key)
    label = jax.random.normal(k1, shape, dtype=jnp.float32)
    prediction = jax.random.normal(k2, shape, dtype=jnp.float32)
    loss = jax.block_until_ready(focal_dice_loss(label, prediction))
    ref = jax.block_until_ready(_reference(label, prediction))
    assert jnp.allclose(loss, ref, rtol=1e-5, atol=1e-5), (shape, loss, ref)


if __name__ == "__main__":
    key = jax.random.PRNGKey(0)
    ks = jax.random.split(key, 4)

    # Primary shape: clean path (HW*C multiple of 128, single row block).
    _check(ks[0], (2, 16, 16, 8))
    # Ragged path: HW*C = 140 -> masked final lanes, C = 4.
    _check(ks[1], (2, 5, 7, 4))
    # B == 1: exercises the extra parallel split axis (dual-TC on v7x).
    _check(ks[2], (1, 256, 256, 8))
    # Multi-step spatial reduction + ragged final block.
    _check(ks[3], (2, 129, 129, 8))

    print("KERNEL_OK")
</pallas_src>

<mosaic_0001>
module attributes {stable_mosaic.version = 11 : i64} {
  func.func @_focal_dice_kernel(%arg0: i32, %arg1: i32, %arg2: i32, %arg3: memref<128x128xbf16, #tpu.memory_space<vmem>>, %arg4: memref<1x16x128xf32, #tpu.memory_space<vmem>>, %arg5: memref<1x16x128xf32, #tpu.memory_space<vmem>>, %arg6: memref<1x1x3x8x128xf32, #tpu.memory_space<vmem>>) attributes {dimension_semantics = [#tpu.dimension_semantics<parallel>, #tpu.dimension_semantics<parallel>, #tpu.dimension_semantics<arbitrary>], iteration_bounds = array<i64: 2, 1, 1>, scalar_prefetch = 0 : i64, scratch_operands = 0 : i64, tpu.core_type = #tpu.core_type<tc>, window_params = [{pipeline_mode = #tpu.pipeline_mode<synchronous>, transform_indices = @transform_0, window_bounds = array<i64: 128, 128>}, {transform_indices = @transform_1, window_bounds = array<i64: 1, 16, 128>}, {transform_indices = @transform_2, window_bounds = array<i64: 1, 16, 128>}, {transform_indices = @transform_3, window_bounds = array<i64: 1, 1, 3, 8, 128>}]} {
    %c0_i32 = arith.constant 0 : i32
    %0 = arith.cmpi eq, %arg2, %c0_i32 : i32
    %1 = arith.extui %0 : i1 to i32
    %c0_i32_0 = arith.constant 0 : i32
    %2 = arith.cmpi ne, %1, %c0_i32_0 : i32
    scf.if %2 {
      %cst_46 = arith.constant 0.000000e+00 : f32
      %76 = vector.broadcast %cst_46 : f32 to vector<3x8x128xf32>
      %c0_47 = arith.constant 0 : index
      %c0_48 = arith.constant 0 : index
      %c0_49 = arith.constant 0 : index
      %c0_50 = arith.constant 0 : index
      %c0_51 = arith.constant 0 : index
      %77 = vector.load %arg6[%c0_47, %c0_48, %c0_49, %c0_50, %c0_51] : memref<1x1x3x8x128xf32, #tpu.memory_space<vmem>>, vector<1x1x3x8x128xf32>
      %78 = vector.shape_cast %77 : vector<1x1x3x8x128xf32> to vector<3x8x128xf32>
      %79 = vector.shape_cast %76 : vector<3x8x128xf32> to vector<1x1x3x8x128xf32>
      tpu.vector_store %arg6[%c0_47, %c0_48, %c0_49, %c0_50, %c0_51], %79 {strides = array<i32>} : memref<1x1x3x8x128xf32, #tpu.memory_space<vmem>>, vector<1x1x3x8x128xf32>,
    } else {
    }
    %c0 = arith.constant 0 : index
    %c0_1 = arith.constant 0 : index
    %3 = vector.load %arg3[%c0, %c0_1] : memref<128x128xbf16, #tpu.memory_space<vmem>>, vector<128x128xbf16>
    %c0_2 = arith.constant 0 : index
    %c0_3 = arith.constant 0 : index
    %c0_4 = arith.constant 0 : index
    %4 = vector.load %arg4[%c0_2, %c0_3, %c0_4] : memref<1x16x128xf32, #tpu.memory_space<vmem>>, vector<1x16x128xf32>
    %5 = vector.shape_cast %4 : vector<1x16x128xf32> to vector<16x128xf32>
    %c0_5 = arith.constant 0 : index
    %c0_6 = arith.constant 0 : index
    %c0_7 = arith.constant 0 : index
    %6 = vector.load %arg5[%c0_5, %c0_6, %c0_7] : memref<1x16x128xf32, #tpu.memory_space<vmem>>, vector<1x16x128xf32>
    %7 = vector.shape_cast %6 : vector<1x16x128xf32> to vector<16x128xf32>
    %cst = arith.constant dense<0xFF800000> : vector<16xf32>
    %8 = vector.multi_reduction <maximumf>, %7, %cst [1] : vector<16x128xf32> to vector<16xf32>
    %9 = vector.shape_cast %8 : vector<16xf32> to vector<16x1xf32>
    %10 = vector.broadcast %9 : vector<16x1xf32> to vector<16x128xf32>
    %11 = arith.subf %7, %10 : vector<16x128xf32>
    %12 = math.exp %11 : vector<16x128xf32>
    %13 = arith.truncf %12 : vector<16x128xf32> to vector<16x128xbf16>
    %14 = arith.extf %13 : vector<16x128xbf16> to vector<16x128xf32>
    %15 = arith.subf %12, %14 : vector<16x128xf32>
    %16 = arith.truncf %15 : vector<16x128xf32> to vector<16x128xbf16>
    %cst_8 = arith.constant dense<0.000000e+00> : vector<16x128xf32>
    %17 = tpu.matmul %13, %3, %cst_8 {dimension_numbers = #tpu.dot_dimension_numbers<[1], [0], [0], [1], [0, 0, 1, 1], [], []>} : vector<16x128xbf16>, vector<128x128xbf16>, vector<16x128xf32> -> vector<16x128xf32>
    %cst_9 = arith.constant dense<0.000000e+00> : vector<16x128xf32>
    %18 = tpu.matmul %16, %3, %cst_9 {dimension_numbers = #tpu.dot_dimension_numbers<[1], [0], [0], [1], [0, 0, 1, 1], [], []>} : vector<16x128xbf16>, vector<128x128xbf16>, vector<16x128xf32> -> vector<16x128xf32>
    %19 = arith.addf %17, %18 : vector<16x128xf32>
    %cst_10 = arith.constant 1.000000e-30 : f32
    %20 = vector.broadcast %cst_10 : f32 to vector<16x128xf32>
    %21 = arith.maximumf %19, %20 : vector<16x128xf32>
    %22 = arith.divf %12, %21 : vector<16x128xf32>
    %cst_11 = arith.constant dense<0xFF800000> : vector<16xf32>
    %23 = vector.multi_reduction <maximumf>, %5, %cst_11 [1] : vector<16x128xf32> to vector<16xf32>
    %24 = vector.shape_cast %23 : vector<16xf32> to vector<16x1xf32>
    %25 = vector.broadcast %24 : vector<16x1xf32> to vector<16x128xf32>
    %26 = arith.subf %5, %25 : vector<16x128xf32>
    %27 = math.exp %26 : vector<16x128xf32>
    %28 = arith.truncf %27 : vector<16x128xf32> to vector<16x128xbf16>
    %29 = arith.extf %28 : vector<16x128xbf16> to vector<16x128xf32>
    %30 = arith.subf %27, %29 : vector<16x128xf32>
    %31 = arith.truncf %30 : vector<16x128xf32> to vector<16x128xbf16>
    %cst_12 = arith.constant dense<0.000000e+00> : vector<16x128xf32>
    %32 = tpu.matmul %28, %3, %cst_12 {dimension_numbers = #tpu.dot_dimension_numbers<[1], [0], [0], [1], [0, 0, 1, 1], [], []>} : vector<16x128xbf16>, vector<128x128xbf16>, vector<16x128xf32> -> vector<16x128xf32>
    %cst_13 = arith.constant dense<0.000000e+00> : vector<16x128xf32>
    %33 = tpu.matmul %31, %3, %cst_13 {dimension_numbers = #tpu.dot_dimension_numbers<[1], [0], [0], [1], [0, 0, 1, 1], [], []>} : vector<16x128xbf16>, vector<128x128xbf16>, vector<16x128xf32> -> vector<16x128xf32>
    %34 = arith.addf %32, %33 : vector<16x128xf32>
    %cst_14 = arith.constant 1.000000e-30 : f32
    %35 = vector.broadcast %cst_14 : f32 to vector<16x128xf32>
    %36 = arith.maximumf %34, %35 : vector<16x128xf32>
    %37 = arith.divf %27, %36 : vector<16x128xf32>
    %38 = arith.mulf %37, %22 : vector<16x128xf32>
    %39 = vector.extract_strided_slice %38 {offsets = [0, 0], sizes = [8, 128], strides = [1, 1]} : vector<16x128xf32> to vector<8x128xf32>
    %40 = vector.extract_strided_slice %38 {offsets = [8, 0], sizes = [8, 128], strides = [1, 1]} : vector<16x128xf32> to vector<8x128xf32>
    %41 = arith.addf %39, %40 : vector<8x128xf32>
    %42 = arith.addf %37, %22 : vector<16x128xf32>
    %43 = vector.extract_strided_slice %42 {offsets = [0, 0], sizes = [8, 128], strides = [1, 1]} : vector<16x128xf32> to vector<8x128xf32>
    %44 = vector.extract_strided_slice %42 {offsets = [8, 0], sizes = [8, 128], strides = [1, 1]} : vector<16x128xf32> to vector<8x128xf32>
    %45 = arith.addf %43, %44 : vector<8x128xf32>
    %cst_15 = arith.constant 0.000000e+00 : f32
    %46 = vector.broadcast %cst_15 : f32 to vector<16x128xf32>
    %47 = arith.subf %46, %37 : vector<16x128xf32>
    %cst_16 = arith.constant 9.99999974E-6 : f32
    %48 = vector.broadcast %cst_16 : f32 to vector<16x128xf32>
    %49 = arith.addf %22, %48 : vector<16x128xf32>
    %50 = math.log %49 : vector<16x128xf32>
    %51 = arith.mulf %47, %50 : vector<16x128xf32>
    %cst_17 = arith.constant 1.000000e+00 : f32
    %52 = vector.broadcast %cst_17 : f32 to vector<16x128xf32>
    %53 = arith.subf %52, %22 : vector<16x128xf32>
    %54 = arith.mulf %53, %51 : vector<16x128xf32>
    %55 = vector.extract_strided_slice %54 {offsets = [0, 0], sizes = [8, 128], strides = [1, 1]} : vector<16x128xf32> to vector<8x128xf32>
    %56 = vector.extract_strided_slice %54 {offsets = [8, 0], sizes = [8, 128], strides = [1, 1]} : vector<16x128xf32> to vector<8x128xf32>
    %57 = arith.addf %55, %56 : vector<8x128xf32>
    %c0_18 = arith.constant 0 : index
    %c0_19 = arith.constant 0 : index
    %c0_20 = arith.constant 0 : index
    %c0_21 = arith.constant 0 : index
    %c0_22 = arith.constant 0 : index
    %58 = vector.load %arg6[%c0_18, %c0_19, %c0_20, %c0_21, %c0_22] : memref<1x1x3x8x128xf32, #tpu.memory_space<vmem>>, vector<1x1x1x8x128xf32>
    %59 = vector.shape_cast %58 : vector<1x1x1x8x128xf32> to vector<8x128xf32>
    %60 = arith.addf %59, %41 : vector<8x128xf32>
    %c0_23 = arith.constant 0 : index
    %c0_24 = arith.constant 0 : index
    %c0_25 = arith.constant 0 : index
    %c0_26 = arith.constant 0 : index
    %c0_27 = arith.constant 0 : index
    %61 = vector.load %arg6[%c0_23, %c0_24, %c0_25, %c0_26, %c0_27] : memref<1x1x3x8x128xf32, #tpu.memory_space<vmem>>, vector<1x1x1x8x128xf32>
    %62 = vector.shape_cast %61 : vector<1x1x1x8x128xf32> to vector<8x128xf32>
    %63 = vector.shape_cast %60 : vector<8x128xf32> to vector<1x1x1x8x128xf32>
    tpu.vector_store %arg6[%c0_23, %c0_24, %c0_25, %c0_26, %c0_27], %63 {strides = array<i32>} : memref<1x1x3x8x128xf32, #tpu.memory_space<vmem>>, vector<1x1x1x8x128xf32>,
    %c0_28 = arith.constant 0 : index
    %c0_29 = arith.constant 0 : index
    %c1 = arith.constant 1 : index
    %c0_30 = arith.constant 0 : index
    %c0_31 = arith.constant 0 : index
    %64 = vector.load %arg6[%c0_28, %c0_29, %c1, %c0_30, %c0_31] : memref<1x1x3x8x128xf32, #tpu.memory_space<vmem>>, vector<1x1x1x8x128xf32>
    %65 = vector.shape_cast %64 : vector<1x1x1x8x128xf32> to vector<8x128xf32>
    %66 = arith.addf %65, %45 : vector<8x128xf32>
    %c0_32 = arith.constant 0 : index
    %c0_33 = arith.constant 0 : index
    %c1_34 = arith.constant 1 : index
    %c0_35 = arith.constant 0 : index
    %c0_36 = arith.constant 0 : index
    %67 = vector.load %arg6[%c0_32, %c0_33, %c1_34, %c0_35, %c0_36] : memref<1x1x3x8x128xf32, #tpu.memory_space<vmem>>, vector<1x1x1x8x128xf32>
    %68 = vector.shape_cast %67 : vector<1x1x1x8x128xf32> to vector<8x128xf32>
    %69 = vector.shape_cast %66 : vector<8x128xf32> to vector<1x1x1x8x128xf32>
    tpu.vector_store %arg6[%c0_32, %c0_33, %c1_34, %c0_35, %c0_36], %69 {strides = array<i32>} : memref<1x1x3x8x128xf32, #tpu.memory_space<vmem>>, vector<1x1x1x8x128xf32>,
    %c0_37 = arith.constant 0 : index
    %c0_38 = arith.constant 0 : index
    %c2 = arith.constant 2 : index
    %c0_39 = arith.constant 0 : index
    %c0_40 = arith.constant 0 : index
    %70 = vector.load %arg6[%c0_37, %c0_38, %c2, %c0_39, %c0_40] : memref<1x1x3x8x128xf32, #tpu.memory_space<vmem>>, vector<1x1x1x8x128xf32>
    %71 = vector.shape_cast %70 : vector<1x1x1x8x128xf32> to vector<8x128xf32>
    %72 = arith.addf %71, %57 : vector<8x128xf32>
    %c0_41 = arith.constant 0 : index
    %c0_42 = arith.constant 0 : index
    %c2_43 = arith.constant 2 : index
    %c0_44 = arith.constant 0 : index
    %c0_45 = arith.constant 0 : index
    %73 = vector.load %arg6[%c0_41, %c0_42, %c2_43, %c0_44, %c0_45] : memref<1x1x3x8x128xf32, #tpu.memory_space<vmem>>, vector<1x1x1x8x128xf32>
    %74 = vector.shape_cast %73 : vector<1x1x1x8x128xf32> to vector<8x128xf32>
    %75 = vector.shape_cast %72 : vector<8x128xf32> to vector<1x1x1x8x128xf32>
    tpu.vector_store %arg6[%c0_41, %c0_42, %c2_43, %c0_44, %c0_45], %75 {strides = array<i32>} : memref<1x1x3x8x128xf32, #tpu.memory_space<vmem>>, vector<1x1x1x8x128xf32>,
    return
  }
  func.func @transform_0(%arg0: i32, %arg1: i32, %arg2: i32) -> (i32, i32) {
    %c0_i32 = arith.constant 0 : i32
    %c0_i32_0 = arith.constant 0 : i32
    %c0_i32_1 = arith.constant 0 : i32
    return %c0_i32, %c0_i32_0 : i32, i32
  }
  func.func @transform_1(%arg0: i32, %arg1: i32, %arg2: i32) -> (i32, i32, i32) {
    %c1_i32 = arith.constant 1 : i32
    %0 = arith.muli %arg1, %c1_i32 : i32
    %1 = arith.addi %0, %arg2 : i32
    %c0_i32 = arith.constant 0 : i32
    %2 = arith.minsi %1, %c0_i32 : i32
    %c0_i32_0 = arith.constant 0 : i32
    %c0_i32_1 = arith.constant 0 : i32
    return %arg0, %2, %c0_i32_0 : i32, i32, i32
  }
  func.func @transform_2(%arg0: i32, %arg1: i32, %arg2: i32) -> (i32, i32, i32) {
    %c1_i32 = arith.constant 1 : i32
    %0 = arith.muli %arg1, %c1_i32 : i32
    %1 = arith.addi %0, %arg2 : i32
    %c0_i32 = arith.constant 0 : i32
    %2 = arith.minsi %1, %c0_i32 : i32
    %c0_i32_0 = arith.constant 0 : i32
    %c0_i32_1 = arith.constant 0 : i32
    return %arg0, %2, %c0_i32_0 : i32, i32, i32
  }
  func.func @transform_3(%arg0: i32, %arg1: i32, %arg2: i32) -> (i32, i32, i32, i32, i32) {
    %c0_i32 = arith.constant 0 : i32
    %c0_i32_0 = arith.constant 0 : i32
    %c0_i32_1 = arith.constant 0 : i32
    %c0_i32_2 = arith.constant 0 : i32
    return %arg0, %arg1, %c0_i32, %c0_i32_0, %c0_i32_1 : i32, i32, i32, i32, i32
  }
}

</mosaic_0001>

<llo_original>
// kernel: tpu_custom_call.1
$region0: #{tpu_custom_call.1}
  #allocation0 [shape = 'u32[]', space=smem, size = 0x4, offset = 0x4, fixed_abs, tag = 'smem constant byte address 0x4 - core index']
  #allocation1 [shape = 'u32[144,128]{1,0:T(1,128)}', space=vmem, size = 0x12000, scoped, tag = 'internal scratch']
  %s0 = inlined_call_operand.hbm [shape: bf16[128,128], index: 0, kind: input, shape index: {}]
  %s1 = inlined_call_operand.hbm [shape: f32[2,16,128], index: 1, kind: input, shape index: {}]
  %s2 = inlined_call_operand.hbm [shape: f32[2,16,128], index: 2, kind: input, shape index: {}]
  %s3 = inlined_call_operand.hbm [shape: f32[2,1,3,8,128], index: 3, kind: output, shape index: {}]
  %s4 = sld [smem:[#allocation0]]
  $region61: #{tpu_custom_call.1} parent=0
    _
  %s6 = ssub.s32 1, %s4
  %s7 = scalar_select 0, %s6, %s4
  $region1: #{tpu_custom_call.1} parent=0
    #allocation2 [shape = 'u8[32768]{0}', space=vmem, size = 0x8000, scoped, tag = 'input window, operand 0, single buffered']
    #allocation3 [shape = 's32[2]{0}', space=sflag, size = 0x8, scoped, tag = 'scoped memory for tpu_custom_call.1']
    #allocation4 [shape = 's32[2]{0}', space=sflag, size = 0x8, scoped, tag = 'scoped memory for tpu_custom_call.1']
    #allocation5 [shape = 'u8[16384]{0}', space=vmem, size = 0x4000, scoped, tag = 'input window, operand 1']
    #allocation6 [shape = 's32[2]{0}', space=sflag, size = 0x8, scoped, tag = 'scoped memory for tpu_custom_call.1']
    #allocation7 [shape = 'u8[16384]{0}', space=vmem, size = 0x4000, scoped, tag = 'input window, operand 2']
    #allocation8 [shape = 'u8[24576]{0}', space=vmem, size = 0x6000, scoped, tag = 'output window, operand 0']
    %8 = vsyncpa [#allocation3], 0
    %9 = vsyncpa [#allocation6], 0
    %s10 = scalar_lea.sflag [#allocation6], 1
    %11 = vsyncpa %s10, 0
    %12 = vsyncpa [#allocation4], 0
    %s13 = scalar_lea.sflag [#allocation4], 1
    %14 = vsyncpa %s13, 0
    loop: start=0, step=1, limit=4
    $region2: #{tpu_custom_call.1} parent=1 // loop_pre_header
      _
    $region3: #{tpu_custom_call.1} parent=1 // loop_header
      %s16 = sphi 0, %s20
      %p17 = scmp.ge.s32.totalorder %s16, 4
      %s23 = sphi 0, %s42
      %s24 = sphi 0, %s38
      %s25 = sphi 0, %s34
      %s26 = sphi 0, %s23
      %s27 = sphi 0, %s24
      %s28 = sphi 0, %s25
      %s29 = sphi 0, %s26
      %s30 = sphi 0, %s27
      %s31 = sphi 0, %s28
      %s43 = sphi 0, %s43
      %s45 = sphi 0, %s43
      %s46 = sphi 0, %s45
      %s60 = sphi 0, %s46
      %s74 = sphi 0, %s76
      %s77 = sphi 0, %s74
      %s78 = sphi 0, %s77
      %s94 = sphi 0, %s78
      %s108 = sphi 0, %s110
      %s111 = sphi 0, %s108
      %s112 = sphi 0, %s111
      %s128 = sphi 0, %s112
      %s136 = sphi 0, %s138
      %s139 = sphi 0, %s136
      %s140 = sphi 0, %s139
      %s156 = sphi 0, %s140
    $region4: #{tpu_custom_call.1} parent=1 // loop_header_branch
      %19 = sbr.rel (%p17) target = $region8
    $region5: #{tpu_custom_call.1} parent=1 // loop_body
      %s21 = ssub.s32 %s16, 1
      %s22 = ssub.s32 %s16, 2
      %s32 = sadd.s32 1, %s25
      %p33 = scmp.ge.s32.totalorder %s32, 1
      %s34 = scalar_select %p33, 0, %s32
      %s35 = sadd.s32 1, %s24
      %s36 = scalar_select %p33, %s35, %s24
      %p37 = scmp.ge.s32.totalorder %s36, 1
      %s38 = scalar_select %p37, 0, %s36
      %s39 = sadd.s32 1, %s23
      %s40 = scalar_select %p37, %s39, %s23
      %p41 = scmp.ge.s32.totalorder %s40, 2
      %s42 = scalar_select %p41, 0, %s40
      %s44 = sadd.s32 %s43, 1
      %p47 = scmp.eq.s32.totalorder %s16, 1
      %p48 = scmp.ne.s32.totalorder %s43, %s45
      %p49 = scmp.eq.s32.totalorder %s16, 0
      %p50 = por %p48, %p49
      %p51 = scmp.ne.s32.totalorder %s43, %s45
      %p52 = scmp.eq.s32.totalorder %s21, 1
      %p53 = por %p51, %p52
      %p54 = scmp.ne.s32.totalorder %s45, %s46
      %p55 = scmp.eq.s32.totalorder %s21, 0
      %p56 = por %p54, %p55
      %p57 = scmp.ne.s32.totalorder %s45, %s46
      %p58 = scmp.eq.s32.totalorder %s22, 1
      %p59 = por %p57, %p58
      %p61 = scmp.ne.s32.totalorder %s46, %s60
      %p62 = scmp.eq.s32.totalorder %s22, 0
      %p63 = por %p61, %p62
      %s64 = sadd.s32 %s24, %s25
      %p65 = scmp.lt.s32.totalorder %s64, 0
      %s66 = scalar_select %p65, %s64, 0
      %s67 = sadd.s32 %s38, %s34
      %p68 = scmp.lt.s32.totalorder %s67, 0
      %s69 = scalar_select %p68, %s67, 0
      %s70 = ssub.s32 %s23, %s42
      %s71 = ssub.s32 %s66, %s69
      %s72 = sor.u32 %s70, %s71
      %p73 = scmp.eq.s32.totalorder %s72, 0
      %s75 = sadd.s32 %s74, 1
      %s76 = scalar_select %p73, %s74, %s75
      %p79 = pneg %p73
      %p80 = scmp.eq.s32.totalorder %s16, 1
      %p81 = por %p79, %p80
      %p82 = scmp.ne.s32.totalorder %s74, %s77
      %p83 = scmp.eq.s32.totalorder %s16, 0
      %p84 = por %p82, %p83
      %p85 = scmp.ne.s32.totalorder %s74, %s77
      %p86 = scmp.eq.s32.totalorder %s21, 1
      %p87 = por %p85, %p86
      %p88 = scmp.ne.s32.totalorder %s77, %s78
      %p89 = scmp.eq.s32.totalorder %s21, 0
      %p90 = por %p88, %p89
      %p91 = scmp.ne.s32.totalorder %s77, %s78
      %p92 = scmp.eq.s32.totalorder %s22, 1
      %p93 = por %p91, %p92
      %p95 = scmp.ne.s32.totalorder %s78, %s94
      %p96 = scmp.eq.s32.totalorder %s22, 0
      %p97 = por %p95, %p96
      %s98 = sadd.s32 %s24, %s25
      %p99 = scmp.lt.s32.totalorder %s98, 0
      %s100 = scalar_select %p99, %s98, 0
      %s101 = sadd.s32 %s38, %s34
      %p102 = scmp.lt.s32.totalorder %s101, 0
      %s103 = scalar_select %p102, %s101, 0
      %s104 = ssub.s32 %s23, %s42
      %s105 = ssub.s32 %s100, %s103
      %s106 = sor.u32 %s104, %s105
      %p107 = scmp.eq.s32.totalorder %s106, 0
      %s109 = sadd.s32 %s108, 1
      %s110 = scalar_select %p107, %s108, %s109
      %p113 = pneg %p107
      %p114 = scmp.eq.s32.totalorder %s16, 1
      %p115 = por %p113, %p114
      %p116 = scmp.ne.s32.totalorder %s108, %s111
      %p117 = scmp.eq.s32.totalorder %s16, 0
      %p118 = por %p116, %p117
      %p119 = scmp.ne.s32.totalorder %s108, %s111
      %p120 = scmp.eq.s32.totalorder %s21, 1
      %p121 = por %p119, %p120
      %p122 = scmp.ne.s32.totalorder %s111, %s112
      %p123 = scmp.eq.s32.totalorder %s21, 0
      %p124 = por %p122, %p123
      %p125 = scmp.ne.s32.totalorder %s111, %s112
      %p126 = scmp.eq.s32.totalorder %s22, 1
      %p127 = por %p125, %p126
      %p129 = scmp.ne.s32.totalorder %s112, %s128
      %p130 = scmp.eq.s32.totalorder %s22, 0
      %p131 = por %p129, %p130
      %s132 = ssub.s32 %s23, %s42
      %s133 = ssub.s32 %s24, %s38
      %s134 = sor.u32 %s132, %s133
      %p135 = scmp.eq.s32.totalorder %s134, 0
      %s137 = sadd.s32 %s136, 1
      %s138 = scalar_select %p135, %s136, %s137
      %p141 = pneg %p135
      %p142 = scmp.eq.s32.totalorder %s16, 1
      %p143 = por %p141, %p142
      %p144 = scmp.ne.s32.totalorder %s136, %s139
      %p145 = scmp.eq.s32.totalorder %s16, 0
      %p146 = por %p144, %p145
      %p147 = scmp.ne.s32.totalorder %s136, %s139
      %p148 = scmp.eq.s32.totalorder %s21, 1
      %p149 = por %p147, %p148
      %p150 = scmp.ne.s32.totalorder %s139, %s140
      %p151 = scmp.eq.s32.totalorder %s21, 0
      %p152 = por %p150, %p151
      %p153 = scmp.ne.s32.totalorder %s139, %s140
      %p154 = scmp.eq.s32.totalorder %s22, 1
      %p155 = por %p153, %p154
      %p157 = scmp.ne.s32.totalorder %s140, %s156
      %p158 = scmp.eq.s32.totalorder %s22, 0
      %p159 = por %p157, %p158
      %p160 = scmp.le.s32.totalorder 1, %s16
      %p161 = scmp.lt.s32.totalorder %s16, 3
      %p162 = pnand %p160, %p161
      %p163 = pneg %p162
      // Predicated region
      $region9: #{tpu_custom_call.1} parent=5 // pred_check
        _
      $region10: #{tpu_custom_call.1} parent=5 // pred_check_branch
        %165 = sbr.rel (%p162) target = $region12
      $region11: #{tpu_custom_call.1} parent=5 // pred_region
        %s166 = ssub.s32 %s16, 1
        // Predicated region
        $region13: #{tpu_custom_call.1} parent=11 // pred_check
          %p167 = pneg %p56
        $region14: #{tpu_custom_call.1} parent=11 // pred_check_branch
          %169 = sbr.rel (%p167) target = $region16
        $region15: #{tpu_custom_call.1} parent=11 // pred_region
          %s171 = ssub.s32 1024, 1024
          %172 = vsyncadd [#allocation3], %s171
          %s173 = sshll.u32 [#allocation2], 4
          %s174 = int_to_ptr.vmem [resolvable:$true] %s173
          %179 = dma.hbm_to_vmem [thread:$0]  %s0, 1024, %s174, [#allocation3], 64, 64, 4
        $region16: #{tpu_custom_call.1} parent=11 // pred_fallthru
          _
      $region12: #{tpu_custom_call.1} parent=5 // pred_fallthru
        _
      %p180 = scmp.lt.s32.totalorder %s16, 2
      // Predicated region
      $region17: #{tpu_custom_call.1} parent=5 // pred_check
        %p181 = pneg %p180
      $region18: #{tpu_custom_call.1} parent=5 // pred_check_branch
        %183 = sbr.rel (%p181) target = $region20
      $region19: #{tpu_custom_call.1} parent=5 // pred_region
        // Predicated region
        $region21: #{tpu_custom_call.1} parent=19 // pred_check
          %p184 = pneg %p84
        $region22: #{tpu_custom_call.1} parent=19 // pred_check_branch
          %186 = sbr.rel (%p184) target = $region24
        $region23: #{tpu_custom_call.1} parent=19 // pred_region
          %s187 = sand.u32 %s16, 1
          %s188 = scalar_lea.sflag [#allocation6], %s187
          %s189 = sand.u32 %s74, 1
          %s190 = smul.addr %s189, 16
          %s191 = scalar_lea.vmem [#allocation5], %s190
          %s192 = sadd.s32 %s24, %s25
          %p193 = scmp.lt.s32.totalorder %s192, 0
          %s194 = scalar_select %p193, %s192, 0
          %s195 = smul.u32 2, %s194
          %s197 = ssub.s32 256, 256
          %198 = vsyncadd %s188, %s197
          %s199 = smul.addr %s23, 2
          %s200 = sadd.s32 %s195, %s199
          %s201 = smul.addr %s200, 128
          %s202 = scalar_lea.hbm %s1, %s201
          %s203 = sshll.u32 %s191, 4
          %s204 = int_to_ptr.vmem [resolvable:$true] %s203
          %209 = dma.hbm_to_vmem [thread:$0]  %s202, 256, %s204, %s188, 128, 128, 8
        $region24: #{tpu_custom_call.1} parent=19 // pred_fallthru
          _
        // Predicated region
        $region25: #{tpu_custom_call.1} parent=19 // pred_check
          %p210 = pneg %p118
        $region26: #{tpu_custom_call.1} parent=19 // pred_check_branch
          %212 = sbr.rel (%p210) target = $region28
        $region27: #{tpu_custom_call.1} parent=19 // pred_region
          %s213 = sand.u32 %s16, 1
          %s214 = scalar_lea.sflag [#allocation6], %s213
          %s215 = sand.u32 %s108, 1
          %s216 = smul.addr %s215, 16
          %s217 = scalar_lea.vmem [#allocation7], %s216
          %s218 = sadd.s32 %s24, %s25
          %p219 = scmp.lt.s32.totalorder %s218, 0
          %s220 = scalar_select %p219, %s218, 0
          %s221 = smul.u32 2, %s220
          %s223 = ssub.s32 256, 256
          %224 = vsyncadd %s214, %s223
          %s225 = smul.addr %s23, 2
          %s226 = sadd.s32 %s221, %s225
          %s227 = smul.addr %s226, 128
          %s228 = scalar_lea.hbm %s2, %s227
          %s229 = sshll.u32 %s217, 4
          %s230 = int_to_ptr.vmem [resolvable:$true] %s229
          %235 = dma.hbm_to_vmem [thread:$0]  %s228, 256, %s230, %s214, 128, 128, 8
        $region28: #{tpu_custom_call.1} parent=19 // pred_fallthru
          _
      $region20: #{tpu_custom_call.1} parent=5 // pred_fallthru
        _
      %p236 = scmp.le.s32.totalorder 1, %s16
      %p237 = scmp.lt.s32.totalorder %s16, 3
      %p238 = pnand %p236, %p237
      %p239 = pneg %p238
      // Predicated region
      $region29: #{tpu_custom_call.1} parent=5 // pred_check
        _
      $region30: #{tpu_custom_call.1} parent=5 // pred_check_branch
        %241 = sbr.rel (%p238) target = $region32
      $region31: #{tpu_custom_call.1} parent=5 // pred_region
        %s242 = ssub.s32 %s16, 1
        // Predicated region
        $region33: #{tpu_custom_call.1} parent=31 // pred_check
          %p243 = pneg %p56
        $region34: #{tpu_custom_call.1} parent=31 // pred_check_branch
          %245 = sbr.rel (%p243) target = $region36
        $region35: #{tpu_custom_call.1} parent=31 // pred_region
          %246 = dma.done [#allocation3], 1024
        $region36: #{tpu_custom_call.1} parent=31 // pred_fallthru
          _
        %s247 = sand.u32 %s21, 1
        %s248 = scalar_lea.sflag [#allocation6], %s247
        %s249 = sand.u32 %s77, 1
        %s250 = smul.addr %s249, 16
        %s251 = scalar_lea.vmem [#allocation5], %s250
        // Predicated region
        $region37: #{tpu_custom_call.1} parent=31 // pred_check
          %p252 = pneg %p90
        $region38: #{tpu_custom_call.1} parent=31 // pred_check_branch
          %254 = sbr.rel (%p252) target = $region40
        $region39: #{tpu_custom_call.1} parent=31 // pred_region
          %255 = dma.done %s248, 256
        $region40: #{tpu_custom_call.1} parent=31 // pred_fallthru
          _
        %s256 = sand.u32 %s21, 1
        %s257 = scalar_lea.sflag [#allocation6], %s256
        %s258 = sand.u32 %s111, 1
        %s259 = smul.addr %s258, 16
        %s260 = scalar_lea.vmem [#allocation7], %s259
        // Predicated region
        $region41: #{tpu_custom_call.1} parent=31 // pred_check
          %p261 = pneg %p124
        $region42: #{tpu_custom_call.1} parent=31 // pred_check_branch
          %263 = sbr.rel (%p261) target = $region44
        $region43: #{tpu_custom_call.1} parent=31 // pred_region
          %264 = dma.done %s257, 256
        $region44: #{tpu_custom_call.1} parent=31 // pred_fallthru
          _
        %p265 = pneg %p56
        %p266 = pneg %p53
        %s267 = sand.u32 %s21, 1
        %s268 = scalar_lea.sflag [#allocation6], %s267
        %s269 = sand.u32 %s77, 1
        %s270 = smul.addr %s269, 16
        %s271 = scalar_lea.vmem [#allocation5], %s270
        %p272 = pneg %p90
        %p273 = pneg %p87
        %s274 = sand.u32 %s21, 1
        %s275 = scalar_lea.sflag [#allocation6], %s274
        %s276 = sand.u32 %s111, 1
        %s277 = smul.addr %s276, 16
        %s278 = scalar_lea.vmem [#allocation7], %s277
        %p279 = pneg %p124
        %p280 = pneg %p121
        %p281 = pneg %p152
        %p282 = pneg %p149
        %s283 = sand.u32 %s139, 1
        %s284 = scalar_lea.sflag [#allocation4], %s283
        %s285 = sand.u32 %s139, 1
        %s286 = smul.addr %s285, 24
        %s287 = scalar_lea.vmem [#allocation8], %s286
        %s288 = sadd.s32 %s27, %s28
        %p289 = scmp.lt.s32.totalorder %s288, 0
        %s290 = scalar_select %p289, %s288, 0
        %s291 = smul.u32 2, %s290
        %s292 = sadd.s32 %s27, %s28
        %p293 = scmp.lt.s32.totalorder %s292, 0
        %s294 = scalar_select %p293, %s292, 0
        %s295 = smul.u32 2, %s294
        %p297 = scmp.eq.s32.totalorder %s28, 0
        // Predicated region
        $region45: #{tpu_custom_call.1} parent=31 // pred_check
          %p298 = pneg %p297
        $region46: #{tpu_custom_call.1} parent=31 // pred_check_branch
          %300 = sbr.rel (%p298) target = $region48
        $region47: #{tpu_custom_call.1} parent=31 // pred_region
          %301 = vst [vmem:[%s287] sm:$0xff] 0.0
          %302 = vst [vmem:[%s287 + $0x8] sm:$0xff] 0.0
          %303 = vst [vmem:[%s287 + $0x10] sm:$0xff] 0.0
        $region48: #{tpu_custom_call.1} parent=31 // pred_fallthru
          _
        %v304 = vld [vmem:[#allocation2] sm:$0xf]
        %v305 = vld [vmem:[#allocation2 + $0x4] sm:$0xf]
        %v306 = vld [vmem:[#allocation2 + $0x8] sm:$0xf]
        %v307 = vld [vmem:[#allocation2 + $0xc] sm:$0xf]
        %v308 = vld [vmem:[#allocation2 + $0x10] sm:$0xf]
        %v309 = vld [vmem:[#allocation2 + $0x14] sm:$0xf]
        %v310 = vld [vmem:[#allocation2 + $0x18] sm:$0xf]
        %v311 = vld [vmem:[#allocation2 + $0x1c] sm:$0xf]
        %v312 = vld [vmem:[#allocation2 + $0x20] sm:$0xf]
        %v313 = vld [vmem:[#allocation2 + $0x24] sm:$0xf]
        %v314 = vld [vmem:[#allocation2 + $0x28] sm:$0xf]
        %v315 = vld [vmem:[#allocation2 + $0x2c] sm:$0xf]
        %v316 = vld [vmem:[#allocation2 + $0x30] sm:$0xf]
        %v317 = vld [vmem:[#allocation2 + $0x34] sm:$0xf]
        %v318 = vld [vmem:[#allocation2 + $0x38] sm:$0xf]
        %v319 = vld [vmem:[#allocation2 + $0x3c] sm:$0xf]
        %v320 = vld [vmem:[%s251] sm:$0xff]
        %v321 = vld [vmem:[%s251 + $0x8] sm:$0xff]
        %v322 = vld [vmem:[%s260] sm:$0xff]
        %v323 = vld [vmem:[%s260 + $0x8] sm:$0xff]
        %324 = vmax.xlane.f32.xlu0 %v322
        %v325 = vpop.xlane.xlu0 %324
        %326 = vmax.xlane.f32.xlu0 %v323
        %v327 = vpop.xlane.xlu0 %326
        %v328 = vsub.f32 %v322, %v325
        %v329 = vsub.f32 %v323, %v327
        %v330 = vmul.f32 %v328, 1.442695
        %v331 = vpow.pop %v330
        %v332 = vmul.f32 %v329, 1.442695
        %v333 = vpow.pop %v332
        %v334 = vpack.c.bf16 %v333, %v331
        %v335 = vunpack.c.l.bf16 %v334
        %v336 = vunpack.c.h.bf16 %v334
        %v337 = vsub.f32 %v331, %v335
        %v338 = vsub.f32 %v333, %v336
        %v339 = vpack.c.bf16 %v338, %v337
        %v356 = vunpack.c.l.b16 %v304
        %v357 = vunpack.c.l.b16 %v305
        %v358 = vunpack.c.l.b16 %v306
        %v359 = vunpack.c.l.b16 %v307
        %v360 = vunpack.c.l.b16 %v308
        %v361 = vunpack.c.l.b16 %v309
        %v362 = vunpack.c.l.b16 %v310
        %v363 = vunpack.c.l.b16 %v311
        %v364 = vunpack.c.l.b16 %v312
        %v365 = vunpack.c.l.b16 %v313
        %v366 = vunpack.c.l.b16 %v314
        %v367 = vunpack.c.l.b16 %v315
        %v368 = vunpack.c.l.b16 %v316
        %v369 = vunpack.c.l.b16 %v317
        %v370 = vunpack.c.l.b16 %v318
        %v371 = vunpack.c.l.b16 %v319
        %v372 = vpack.c.b16 %v357, %v356
        %v373 = vpack.c.b16 %v359, %v358
        %v374 = vpack.c.b16 %v361, %v360
        %v375 = vpack.c.b16 %v363, %v362
        %v376 = vpack.c.b16 %v365, %v364
        %v377 = vpack.c.b16 %v367, %v366
        %v378 = vpack.c.b16 %v369, %v368
        %v379 = vpack.c.b16 %v371, %v370
        %388 = vmatprep.subr.bf16.mxu0 0
        %389 = vmatpush1.bf16.msra.mxu0 %v379
        %390 = vmatprep.subr.bf16.mxu0 0
        %391 = vmatpush1.bf16.msra.mxu0 %v378
        %392 = vmatprep.subr.bf16.mxu0 0
        %393 = vmatpush1.bf16.msra.mxu0 %v377
        %394 = vmatprep.subr.bf16.mxu0 0
        %395 = vmatpush1.bf16.msra.mxu0 %v376
        %396 = vmatprep.subr.bf16.mxu0 0
        %397 = vmatpush1.bf16.msra.mxu0 %v375
        %398 = vmatprep.subr.bf16.mxu0 0
        %399 = vmatpush1.bf16.msra.mxu0 %v374
        %400 = vmatprep.subr.bf16.mxu0 0
        %401 = vmatpush1.bf16.msra.mxu0 %v373
        %402 = vmatprep.subr.bf16.mxu0 0
        %403 = vmatpush1.bf16.msra.mxu0 %v372
        %404 = vmatprep.subr.bf16.mxu0 0
        %405 = vmatpush2.bf16.msra.mxu0 0
        %406 = vmatprep.subr.bf16.mxu0 0
        %407 = vmatpush2.bf16.msra.mxu0 0
        %408 = vmatprep.subr.bf16.mxu0 0
        %409 = vmatpush2.bf16.msra.mxu0 0
        %410 = vmatprep.subr.bf16.mxu0 0
        %411 = vmatpush2.bf16.msra.mxu0 0
        %412 = vmatprep.subr.bf16.mxu0 0
        %413 = vmatpush2.bf16.msra.mxu0 0
        %414 = vmatprep.subr.bf16.mxu0 0
        %415 = vmatpush2.bf16.msra.mxu0 0
        %416 = vmatprep.subr.bf16.mxu0 0
        %417 = vmatpush2.bf16.msra.mxu0 0
        %418 = vmatprep.subr.bf16.mxu0 0
        %419 = vmatpush2.bf16.msra.mxu0 0
        %420 = vmatprep.mubr.bf16.mxu0 0
        %421 = vmatmul.mubr.bf16.gmra.mxu0 %v339
        %v422 = vpop.f32.mrf.mxu0
        %v423 = vadd.f32 0.0, %v422
        %v424 = vpop.f32.mrf.mxu0
        %v425 = vpop.f32.mrf.mxu0
        %v426 = vadd.f32 0.0, %v425
        %v427 = vpop.f32.mrf.mxu0
        %428 = vdwg.mxu0
        %429 = vmatprep.subr.bf16.mxu0 0
        %430 = vmatpush1.bf16.msra.mxu0 %v379
        %431 = vmatprep.subr.bf16.mxu0 0
        %432 = vmatpush1.bf16.msra.mxu0 %v378
        %433 = vmatprep.subr.bf16.mxu0 0
        %434 = vmatpush1.bf16.msra.mxu0 %v377
        %435 = vmatprep.subr.bf16.mxu0 0
        %436 = vmatpush1.bf16.msra.mxu0 %v376
        %437 = vmatprep.subr.bf16.mxu0 0
        %438 = vmatpush1.bf16.msra.mxu0 %v375
        %439 = vmatprep.subr.bf16.mxu0 0
        %440 = vmatpush1.bf16.msra.mxu0 %v374
        %441 = vmatprep.subr.bf16.mxu0 0
        %442 = vmatpush1.bf16.msra.mxu0 %v373
        %443 = vmatprep.subr.bf16.mxu0 0
        %444 = vmatpush1.bf16.msra.mxu0 %v372
        %445 = vmatprep.subr.bf16.mxu0 0
        %446 = vmatpush2.bf16.msra.mxu0 0
        %447 = vmatprep.subr.bf16.mxu0 0
        %448 = vmatpush2.bf16.msra.mxu0 0
        %449 = vmatprep.subr.bf16.mxu0 0
        %450 = vmatpush2.bf16.msra.mxu0 0
        %451 = vmatprep.subr.bf16.mxu0 0
        %452 = vmatpush2.bf16.msra.mxu0 0
        %453 = vmatprep.subr.bf16.mxu0 0
        %454 = vmatpush2.bf16.msra.mxu0 0
        %455 = vmatprep.subr.bf16.mxu0 0
        %456 = vmatpush2.bf16.msra.mxu0 0
        %457 = vmatprep.subr.bf16.mxu0 0
        %458 = vmatpush2.bf16.msra.mxu0 0
        %459 = vmatprep.subr.bf16.mxu0 0
        %460 = vmatpush2.bf16.msra.mxu0 0
        %461 = vmatprep.mubr.bf16.mxu0 0
        %462 = vmatmul.mubr.bf16.gmra.mxu0 %v334
        %v463 = vpop.f32.mrf.mxu0
        %v464 = vadd.f32 %v423, %v463
        %v465 = vpop.f32.mrf.mxu0
        %v466 = vpop.f32.mrf.mxu0
        %v467 = vadd.f32 %v426, %v466
        %v468 = vpop.f32.mrf.mxu0
        %469 = vdwg.mxu0
        %v470 = vmax.f32 %v464, 1e-30
        %v471 = vmax.f32 %v467, 1e-30
        %v472 = vrcp.pop %v470
        %v473 = vmul.f32 %v331, %v472
        %v474 = vrcp.pop %v471
        %v475 = vmul.f32 %v333, %v474
        %476 = vmax.xlane.f32.xlu0 %v320
        %v477 = vpop.xlane.xlu0 %476
        %478 = vmax.xlane.f32.xlu0 %v321
        %v479 = vpop.xlane.xlu0 %478
        %v480 = vsub.f32 %v320, %v477
        %v481 = vsub.f32 %v321, %v479
        %v482 = vmul.f32 %v480, 1.442695
        %v483 = vpow.pop %v482
        %v484 = vmul.f32 %v481, 1.442695
        %v485 = vpow.pop %v484
        %v486 = vpack.c.bf16 %v485, %v483
        %v487 = vunpack.c.l.bf16 %v486
        %v488 = vunpack.c.h.bf16 %v486
        %v489 = vsub.f32 %v483, %v487
        %v490 = vsub.f32 %v485, %v488
        %v491 = vpack.c.bf16 %v490, %v489
        %492 = vmatprep.subr.bf16.mxu0 0
        %493 = vmatpush1.bf16.msra.mxu0 %v379
        %494 = vmatprep.subr.bf16.mxu0 0
        %495 = vmatpush1.bf16.msra.mxu0 %v378
        %496 = vmatprep.subr.bf16.mxu0 0
        %497 = vmatpush1.bf16.msra.mxu0 %v377
        %498 = vmatprep.subr.bf16.mxu0 0
        %499 = vmatpush1.bf16.msra.mxu0 %v376
        %500 = vmatprep.subr.bf16.mxu0 0
        %501 = vmatpush1.bf16.msra.mxu0 %v375
        %502 = vmatprep.subr.bf16.mxu0 0
        %503 = vmatpush1.bf16.msra.mxu0 %v374
        %504 = vmatprep.subr.bf16.mxu0 0
        %505 = vmatpush1.bf16.msra.mxu0 %v373
        %506 = vmatprep.subr.bf16.mxu0 0
        %507 = vmatpush1.bf16.msra.mxu0 %v372
        %508 = vmatprep.subr.bf16.mxu0 0
        %509 = vmatpush2.bf16.msra.mxu0 0
        %510 = vmatprep.subr.bf16.mxu0 0
        %511 = vmatpush2.bf16.msra.mxu0 0
        %512 = vmatprep.subr.bf16.mxu0 0
        %513 = vmatpush2.bf16.msra.mxu0 0
        %514 = vmatprep.subr.bf16.mxu0 0
        %515 = vmatpush2.bf16.msra.mxu0 0
        %516 = vmatprep.subr.bf16.mxu0 0
        %517 = vmatpush2.bf16.msra.mxu0 0
        %518 = vmatprep.subr.bf16.mxu0 0
        %519 = vmatpush2.bf16.msra.mxu0 0
        %520 = vmatprep.subr.bf16.mxu0 0
        %521 = vmatpush2.bf16.msra.mxu0 0
        %522 = vmatprep.subr.bf16.mxu0 0
        %523 = vmatpush2.bf16.msra.mxu0 0
        %524 = vmatprep.mubr.bf16.mxu0 0
        %525 = vmatmul.mubr.bf16.gmra.mxu0 %v491
        %v526 = vpop.f32.mrf.mxu0
        %v527 = vadd.f32 0.0, %v526
        %v528 = vpop.f32.mrf.mxu0
        %v529 = vpop.f32.mrf.mxu0
        %v530 = vadd.f32 0.0, %v529
        %v531 = vpop.f32.mrf.mxu0
        %532 = vdwg.mxu0
        %533 = vmatprep.subr.bf16.mxu0 0
        %534 = vmatpush1.bf16.msra.mxu0 %v379
        %535 = vmatprep.subr.bf16.mxu0 0
        %536 = vmatpush1.bf16.msra.mxu0 %v378
        %537 = vmatprep.subr.bf16.mxu0 0
        %538 = vmatpush1.bf16.msra.mxu0 %v377
        %539 = vmatprep.subr.bf16.mxu0 0
        %540 = vmatpush1.bf16.msra.mxu0 %v376
        %541 = vmatprep.subr.bf16.mxu0 0
        %542 = vmatpush1.bf16.msra.mxu0 %v375
        %543 = vmatprep.subr.bf16.mxu0 0
        %544 = vmatpush1.bf16.msra.mxu0 %v374
        %545 = vmatprep.subr.bf16.mxu0 0
        %546 = vmatpush1.bf16.msra.mxu0 %v373
        %547 = vmatprep.subr.bf16.mxu0 0
        %548 = vmatpush1.bf16.msra.mxu0 %v372
        %549 = vmatprep.subr.bf16.mxu0 0
        %550 = vmatpush2.bf16.msra.mxu0 0
        %551 = vmatprep.subr.bf16.mxu0 0
        %552 = vmatpush2.bf16.msra.mxu0 0
        %553 = vmatprep.subr.bf16.mxu0 0
        %554 = vmatpush2.bf16.msra.mxu0 0
        %555 = vmatprep.subr.bf16.mxu0 0
        %556 = vmatpush2.bf16.msra.mxu0 0
        %557 = vmatprep.subr.bf16.mxu0 0
        %558 = vmatpush2.bf16.msra.mxu0 0
        %559 = vmatprep.subr.bf16.mxu0 0
        %560 = vmatpush2.bf16.msra.mxu0 0
        %561 = vmatprep.subr.bf16.mxu0 0
        %562 = vmatpush2.bf16.msra.mxu0 0
        %563 = vmatprep.subr.bf16.mxu0 0
        %564 = vmatpush2.bf16.msra.mxu0 0
        %565 = vmatprep.mubr.bf16.mxu0 0
        %566 = vmatmul.mubr.bf16.gmra.mxu0 %v486
        %v567 = vpop.f32.mrf.mxu0
        %v568 = vadd.f32 %v527, %v567
        %v569 = vpop.f32.mrf.mxu0
        %v570 = vpop.f32.mrf.mxu0
        %v571 = vadd.f32 %v530, %v570
        %v572 = vpop.f32.mrf.mxu0
        %573 = vdwg.mxu0
        %v574 = vmax.f32 %v568, 1e-30
        %v575 = vmax.f32 %v571, 1e-30
        %v576 = vrcp.pop %v574
        %v577 = vmul.f32 %v483, %v576
        %v578 = vrcp.pop %v575
        %v579 = vmul.f32 %v485, %v578
        %v580 = vmul.f32 %v577, %v473
        %v581 = vmul.f32 %v579, %v475
        %v582 = vadd.f32 %v580, %v581
        %v583 = vadd.f32 %v577, %v473
        %v584 = vadd.f32 %v579, %v475
        %v585 = vadd.f32 %v583, %v584
        %v586 = vsub.f32 0.0, %v577
        %v587 = vsub.f32 0.0, %v579
        %v588 = vadd.f32 %v473, 1e-05
        %v589 = vadd.f32 %v475, 1e-05
        %v590 = vlog2.pop %v588
        %v591 = vmul.f32 %v590, 0.6931472
        %v592 = vlog2.pop %v589
        %v593 = vmul.f32 %v592, 0.6931472
        %v594 = vmul.f32 %v586, %v591
        %v595 = vmul.f32 %v587, %v593
        %v596 = vsub.f32 1.0, %v473
        %v597 = vsub.f32 1.0, %v475
        %v598 = vmul.f32 %v596, %v594
        %v599 = vmul.f32 %v597, %v595
        %v600 = vadd.f32 %v598, %v599
        %v601 = vld [vmem:[%s287] sm:$0xff]
        %v602 = vadd.f32 %v601, %v582
        %603 = vst [vmem:[%s287] sm:$0xff] %v602
        %s604 = scalar_lea.vmem %s287, 8 [#allocation8]
        %v605 = vld [vmem:[%s604] sm:$0xff]
        %v606 = vadd.f32 %v605, %v585
        %607 = vst [vmem:[%s604] sm:$0xff] %v606
        %s608 = scalar_lea.vmem %s287, 16 [#allocation8]
        %v609 = vld [vmem:[%s608] sm:$0xff]
        %v610 = vadd.f32 %v609, %v600
        %611 = vst [vmem:[%s608] sm:$0xff] %v610
        %s612 = sand.u32 %s139, 1
        %s613 = scalar_lea.sflag [#allocation4], %s612
        %s614 = sand.u32 %s139, 1
        %s615 = smul.addr %s614, 24
        %s616 = scalar_lea.vmem [#allocation8], %s615
        // Predicated region
        $region49: #{tpu_custom_call.1} parent=31 // pred_check
          %p617 = pneg %p149
        $region50: #{tpu_custom_call.1} parent=31 // pred_check_branch
          %619 = sbr.rel (%p617) target = $region52
        $region51: #{tpu_custom_call.1} parent=31 // pred_region
          %s621 = ssub.s32 384, 384
          %622 = vsyncadd %s613, %s621
          %s623 = smul.addr %s27, 3
          %s624 = smul.addr %s26, 3
          %s625 = sadd.s32 %s623, %s624
          %s626 = smul.addr %s625, 128
          %s627 = scalar_lea.hbm %s3, %s626
          %s628 = sshll.u32 %s616, 4
          %s629 = int_to_ptr.vmem [resolvable:$true] %s628
          %634 = dma.vmem_to_hbm [thread:$0]  %s629, 384, %s627, %s613, 128, 128, 8
        $region52: #{tpu_custom_call.1} parent=31 // pred_fallthru
          _
      $region32: #{tpu_custom_call.1} parent=5 // pred_fallthru
        _
      %p635 = scmp.le.s32.totalorder 2, %s16
      // Predicated region
      $region53: #{tpu_custom_call.1} parent=5 // pred_check
        %p636 = pneg %p635
      $region54: #{tpu_custom_call.1} parent=5 // pred_check_branch
        %638 = sbr.rel (%p636) target = $region56
      $region55: #{tpu_custom_call.1} parent=5 // pred_region
        %s639 = ssub.s32 %s16, 2
        // Predicated region
        $region57: #{tpu_custom_call.1} parent=55 // pred_check
          %p640 = pneg %p155
        $region58: #{tpu_custom_call.1} parent=55 // pred_check_branch
          %642 = sbr.rel (%p640) target = $region60
        $region59: #{tpu_custom_call.1} parent=55 // pred_region
          %s643 = sand.u32 %s140, 1
          %s644 = scalar_lea.sflag [#allocation4], %s643
          %s645 = sand.u32 %s140, 1
          %s646 = smul.addr %s645, 24
          %s647 = scalar_lea.vmem [#allocation8], %s646
          %648 = dma.done %s644, 384
        $region60: #{tpu_custom_call.1} parent=55 // pred_fallthru
          _
      $region56: #{tpu_custom_call.1} parent=5 // pred_fallthru
        _
    $region6: #{tpu_custom_call.1} parent=1 // loop_footer
      %s20 = sadd.s32 1, %s16
    $region7: #{tpu_custom_call.1} parent=1 // loop_footer_branch
      %15 = sbr.rel target = $region3
    $region8: #{tpu_custom_call.1} parent=1 // loop_exit
      _
    %649 = vsyncpa [#allocation3], 1
    %s650 = scalar_lea.sflag [#allocation3], 1
    %651 = vsyncpa %s650, 1
    %652 = vsyncpa [#allocation6], 1
    %s653 = scalar_lea.sflag [#allocation6], 1
    %654 = vsyncpa %s653, 1
    %655 = vsyncpa [#allocation4], 1
    %s656 = scalar_lea.sflag [#allocation4], 1
    %657 = vsyncpa %s656, 1

</llo_original>
